<compile_context>
chip_gen: v7x
topology: tpu7x:2x2x1
jax: 0.10.0
libtpu: 0.0.40
codegen_flags: <defaults>
</compile_context>

<pallas_src>
import functools
import math
from typing import Sequence

import numpy as np
import jax
import jax.numpy as jnp
from jax.experimental import pallas as pl
from jax.experimental.pallas import tpu as pltpu


# Cast the HBM-bound table (and the tap matrix) to bf16.  Halves input DMA
# bytes and cuts MXU passes ~3x on v5e; costs ~1e-3 relative accuracy.
_USE_BF16_TABLE = False


# ----------------------------------------------------------------------------
# 1-D bicubic interpolation weights (exact PyTorch upsample_bicubic2d
# semantics: align_corners=False, antialias=False, A=-0.75, border clamp)
# ----------------------------------------------------------------------------
def _bicubic_weight_matrix_1d(out_size: int, in_size: int) -> np.ndarray:
    A = -0.75

    def c1(x):  # |x| <= 1
        return ((A + 2.0) * x - (A + 3.0)) * x * x + 1.0

    def c2(x):  # 1 < |x| < 2
        return ((A * x - 5.0 * A) * x + 8.0 * A) * x - 4.0 * A

    W = np.zeros((out_size, in_size), dtype=np.float64)
    if out_size == in_size:
        np.fill_diagonal(W, 1.0)
        return W
    scale = in_size / out_size
    for i in range(out_size):
        src = scale * (i + 0.5) - 0.5           # area_pixel_compute_source_index
        fi = math.floor(src)
        t = src - fi
        coeffs = (c2(t + 1.0), c1(t), c1(1.0 - t), c2(2.0 - t))
        for k, wk in enumerate(coeffs):
            idx = min(max(fi - 1 + k, 0), in_size - 1)   # border clamp
            W[i, idx] += wk
    return W


@functools.lru_cache(maxsize=None)
def _resample_kron(dims: tuple, spatial: tuple) -> jnp.ndarray:
    """Cached device-resident dense tap matrix kron(W_h, W_w): (L_out, L_in)."""
    wh = _bicubic_weight_matrix_1d(dims[0], spatial[0])   # (H_out, H_in)
    ww = _bicubic_weight_matrix_1d(dims[1], spatial[1])   # (W_out, W_in)
    return jnp.asarray(np.kron(wh, ww), dtype=jnp.float32)


# ----------------------------------------------------------------------------
# Pallas kernel: one dense MXU contraction per channel tile
# ----------------------------------------------------------------------------
def _resample_kernel(k_ref, p_ref, o_ref):
    # (L_out, L_in) @ (L_in, tc) -> (L_out, tc); f32 accumulation on the MXU.
    o_ref[...] = jnp.dot(
        k_ref[...], p_ref[...],
        preferred_element_type=jnp.float32).astype(o_ref.dtype)


_VMEM_BUDGET_BYTES = 24 * 1024 * 1024   # comfortably under the 32 MiB default


def _pick_channel_tile(l_in: int, l_out: int, c_pad: int,
                       target_steps: int = 4) -> int:
    """Channel tile (multiple of 128 dividing c_pad).

    Prefer a grid of ~target_steps tiles (>=2 whenever possible) so the
    BlockSpec pipeline overlaps DMA with compute and the 'parallel' grid axis
    can be sharded across v7x's two TensorCores, while staying in VMEM budget.
    """
    bpe_in = 2 if _USE_BF16_TABLE else 4
    cands = [128 * d for d in range(1, c_pad // 128 + 1) if c_pad % (128 * d) == 0]

    def footprint(tc):
        # resident tap matrix (count double-buffered to be safe)
        #   + double-buffered input block + double-buffered output block
        return (2 * bpe_in * l_out * l_in
                + 2 * bpe_in * l_in * tc
                + 2 * 4 * l_out * tc)

    fitting = [tc for tc in cands if footprint(tc) <= _VMEM_BUDGET_BYTES] or [128]
    multi = [tc for tc in fitting if c_pad // tc >= 2]
    if multi:
        # step count closest to target_steps; ties -> bigger tile (fewer
        # fixed ~0.35 us per-step costs).
        return min(multi, key=lambda tc: (abs(c_pad // tc - target_steps), -tc))
    return max(fitting)


def _bicubic_resample(positions: jnp.ndarray, kron: jnp.ndarray) -> jnp.ndarray:
    """positions: (L_in, C), kron: (L_out, L_in) -> (L_out, C) float32."""
    l_out, l_in = kron.shape
    c = positions.shape[-1]
    c_pad = -(-c // 128) * 128                      # lane-dense channel dim

    table_dtype = jnp.bfloat16 if _USE_BF16_TABLE else jnp.float32
    p = positions.astype(table_dtype)
    if c_pad != c:
        p = jnp.pad(p, ((0, 0), (0, c_pad - c)))
    k = kron.astype(table_dtype)

    tc = _pick_channel_tile(l_in, l_out, c_pad)
    n_tiles = c_pad // tc

    out = pl.pallas_call(
        _resample_kernel,
        out_shape=jax.ShapeDtypeStruct((l_out, c_pad), jnp.float32),
        grid_spec=pltpu.PrefetchScalarGridSpec(
            num_scalar_prefetch=0,
            grid=(n_tiles,),
            in_specs=[
                # tap matrix: constant index_map -> DMA'd once, resident
                pl.BlockSpec((l_out, l_in), lambda j: (0, 0)),
                # table: channel-tiled, lane-dense
                pl.BlockSpec((l_in, tc), lambda j: (0, j)),
            ],
            out_specs=pl.BlockSpec((l_out, tc), lambda j: (0, j)),
        ),
        compiler_params=pltpu.CompilerParams(
            dimension_semantics=("parallel",)),
    )(k, p)

    if c_pad != c:
        out = out[:, :c]
    return out


_bicubic_resample_jit = jax.jit(_bicubic_resample)


# ----------------------------------------------------------------------------
# Module equivalent
# ----------------------------------------------------------------------------
class LearnablePositionPallas:
    def __init__(self, hidden_size: int, spatial_size: Sequence[int],
                 dropout: float = 0.0, *, key):
        assert len(spatial_size) == 2, "bicubic path requires 2D spatial_size"
        total = math.prod(spatial_size)
        # torch.nn.init.trunc_normal_(std=0.02) truncates at ABSOLUTE +/-2
        # (= 100 sigma), i.e. it is effectively an untruncated N(0, 0.02^2);
        # clip only as a formality to match the hard bound.
        self.positions = jnp.clip(
            0.02 * jax.random.normal(key, (total, hidden_size), jnp.float32),
            -2.0, 2.0)
        self.spatial_size = tuple(spatial_size)
        self.dropout = dropout
        self.training = False

    def __call__(self, dims: Sequence[int] | None) -> jnp.ndarray:
        dims = tuple(dims) if dims else self.spatial_size
        L = math.prod(dims)
        C = self.positions.shape[-1]
        if dims == self.spatial_size:
            out = self.positions
        else:
            kron = _resample_kron(dims, self.spatial_size)
            out = _bicubic_resample_jit(self.positions, kron)
        # TODO(synk): dropout with p>0 in training mode (PyTorch RNG semantics)
        # is not implemented; with p=0.0 / eval it is an identity, as done here.
        return out.reshape(1, L, C)


if __name__ == "__main__":
    key = jax.random.PRNGKey(0)
    spatial = (16, 16)

    # --- small module (hidden=32 -> single channel tile) ---------------------
    mod = LearnablePositionPallas(32, spatial, dropout=0.0, key=key)

    out_same = mod(None)                      # identity path
    assert out_same.shape == (1, 16 * 16, 32)

    out_dn = mod((8, 8))                      # bicubic downsample
    jax.block_until_ready(out_dn)
    assert out_dn.shape == (1, 8 * 8, 32)

    out_up = mod((24, 24))                    # bicubic upsample
    jax.block_until_ready(out_up)
    assert out_up.shape == (1, 24 * 24, 32)

    # --- wider module (hidden=256 -> multi-tile 'parallel' grid) -------------
    key2 = jax.random.PRNGKey(0)
    mod_wide = LearnablePositionPallas(256, spatial, dropout=0.0, key=key2)
    out_wide = mod_wide((12, 12))
    jax.block_until_ready(out_wide)
    assert out_wide.shape == (1, 12 * 12, 256)

    # --- cross-check against an exact float64 reference ----------------------
    def _ref(positions, dims, spatial):
        p64 = np.asarray(positions, dtype=np.float64)
        wh64 = _bicubic_weight_matrix_1d(dims[0], spatial[0])
        ww64 = _bicubic_weight_matrix_1d(dims[1], spatial[1])
        return (np.kron(wh64, ww64) @ p64).reshape(1, dims[0] * dims[1], -1)

    checks = [
        (mod.positions, (8, 8), out_dn),
        (mod.positions, (24, 24), out_up),
        (mod_wide.positions, (12, 12), out_wide),
    ]
    for pos, dims, got in checks:
        np.testing.assert_allclose(
            np.asarray(got, dtype=np.float64), _ref(pos, dims, spatial),
            atol=1e-4, rtol=1e-3)

    print("KERNEL_OK")
</pallas_src>

<mosaic_0001>
module attributes {stable_mosaic.version = 11 : i64} {
  func.func @_resample_kernel(%arg0: i32, %arg1: memref<64x256xf32, #tpu.memory_space<vmem>>, %arg2: memref<256x128xf32, #tpu.memory_space<vmem>>, %arg3: memref<64x128xf32, #tpu.memory_space<vmem>>) attributes {dimension_semantics = [#tpu.dimension_semantics<parallel>], iteration_bounds = array<i64: 1>, scalar_prefetch = 0 : i64, scratch_operands = 0 : i64, tpu.core_type = #tpu.core_type<tc>, window_params = [{pipeline_mode = #tpu.pipeline_mode<synchronous>, transform_indices = @transform_0, window_bounds = array<i64: 64, 256>}, {transform_indices = @transform_1, window_bounds = array<i64: 256, 128>}, {transform_indices = @transform_2, window_bounds = array<i64: 64, 128>}]} {
    %c0 = arith.constant 0 : index
    %c0_0 = arith.constant 0 : index
    %0 = vector.load %arg1[%c0, %c0_0] : memref<64x256xf32, #tpu.memory_space<vmem>>, vector<64x256xf32>
    %c0_1 = arith.constant 0 : index
    %c0_2 = arith.constant 0 : index
    %1 = vector.load %arg2[%c0_1, %c0_2] : memref<256x128xf32, #tpu.memory_space<vmem>>, vector<256x128xf32>
    %cst = arith.constant dense<0.000000e+00> : vector<64x128xf32>
    %2 = tpu.matmul %0, %1, %cst {dimension_numbers = #tpu.dot_dimension_numbers<[1], [0], [0], [1], [0, 0, 1, 1], [], []>} : vector<64x256xf32>, vector<256x128xf32>, vector<64x128xf32> -> vector<64x128xf32>
    %c0_3 = arith.constant 0 : index
    %c0_4 = arith.constant 0 : index
    %3 = vector.load %arg3[%c0_3, %c0_4] : memref<64x128xf32, #tpu.memory_space<vmem>>, vector<64x128xf32>
    tpu.vector_store %arg3[%c0_3, %c0_4], %2 {strides = array<i32>} : memref<64x128xf32, #tpu.memory_space<vmem>>, vector<64x128xf32>,
    return
  }
  func.func @transform_0(%arg0: i32) -> (i32, i32) {
    %c0_i32 = arith.constant 0 : i32
    %c0_i32_0 = arith.constant 0 : i32
    %c0_i32_1 = arith.constant 0 : i32
    return %c0_i32, %c0_i32_0 : i32, i32
  }
  func.func @transform_1(%arg0: i32) -> (i32, i32) {
    %c0_i32 = arith.constant 0 : i32
    %c0_i32_0 = arith.constant 0 : i32
    return %c0_i32, %arg0 : i32, i32
  }
  func.func @transform_2(%arg0: i32) -> (i32, i32) {
    %c0_i32 = arith.constant 0 : i32
    %c0_i32_0 = arith.constant 0 : i32
    return %c0_i32, %arg0 : i32, i32
  }
}

</mosaic_0001>

<llo_original>
// kernel: _bicubic_resample.1
$region0: #{_bicubic_resample.1}
  #allocation0 [shape = 'u32[]', space=smem, size = 0x4, offset = 0x4, fixed_abs, tag = 'smem constant byte address 0x4 - core index']
  #allocation1 [shape = 'u32[144,128]{1,0:T(1,128)}', space=vmem, size = 0x12000, scoped, tag = 'internal scratch']
  %s0 = inlined_call_operand.vmem [shape: f32[64,256], index: 0, kind: input, shape index: {}]
  %s1 = inlined_call_operand.vmem [shape: f32[256,128], index: 1, kind: input, shape index: {}]
  %s2 = inlined_call_operand.vmem [shape: f32[64,128], index: 2, kind: output, shape index: {}]
  %s3 = sld [smem:[#allocation0]]
  $region18: #{_bicubic_resample.1} parent=0
    _
  %s5 = ssub.s32 1, %s3
  %s6 = scalar_select 0, %s5, %s3
  // Predicated region
  $region2: #{_bicubic_resample.1} parent=0 // pred_check
    _
  $region3: #{_bicubic_resample.1} parent=0 // pred_check_branch
    %8 = sbr.rel (0) target = $region5
  $region4: #{_bicubic_resample.1} parent=0 // pred_region
    _
  $region5: #{_bicubic_resample.1} parent=0 // pred_fallthru
    _
  // Predicated region
  $region6: #{_bicubic_resample.1} parent=0 // pred_check
    _
  $region7: #{_bicubic_resample.1} parent=0 // pred_check_branch
    %10 = sbr.rel (0) target = $region9
  $region8: #{_bicubic_resample.1} parent=0 // pred_region
    _
  $region9: #{_bicubic_resample.1} parent=0 // pred_fallthru
    _
  %v11 = vld [vmem:[%s0] sm:$0xff]
  %v12 = vld [vmem:[%s0 + $0x8] sm:$0xff]
  %v13 = vld [vmem:[%s0 + $0x10] sm:$0xff]
  %v14 = vld [vmem:[%s0 + $0x18] sm:$0xff]
  %v15 = vld [vmem:[%s0 + $0x20] sm:$0xff]
  %v16 = vld [vmem:[%s0 + $0x28] sm:$0xff]
  %v17 = vld [vmem:[%s0 + $0x30] sm:$0xff]
  %v18 = vld [vmem:[%s0 + $0x38] sm:$0xff]
  %v19 = vld [vmem:[%s0 + $0x40] sm:$0xff]
  %v20 = vld [vmem:[%s0 + $0x48] sm:$0xff]
  %v21 = vld [vmem:[%s0 + $0x50] sm:$0xff]
  %v22 = vld [vmem:[%s0 + $0x58] sm:$0xff]
  %v23 = vld [vmem:[%s0 + $0x60] sm:$0xff]
  %v24 = vld [vmem:[%s0 + $0x68] sm:$0xff]
  %v25 = vld [vmem:[%s0 + $0x70] sm:$0xff]
  %v26 = vld [vmem:[%s0 + $0x78] sm:$0xff]
  %v27 = vld [vmem:[%s1] sm:$0xff]
  %v28 = vld [vmem:[%s1 + $0x8] sm:$0xff]
  %v29 = vld [vmem:[%s1 + $0x10] sm:$0xff]
  %v30 = vld [vmem:[%s1 + $0x18] sm:$0xff]
  %v31 = vld [vmem:[%s1 + $0x20] sm:$0xff]
  %v32 = vld [vmem:[%s1 + $0x28] sm:$0xff]
  %v33 = vld [vmem:[%s1 + $0x30] sm:$0xff]
  %v34 = vld [vmem:[%s1 + $0x38] sm:$0xff]
  %v35 = vld [vmem:[%s1 + $0x40] sm:$0xff]
  %v36 = vld [vmem:[%s1 + $0x48] sm:$0xff]
  %v37 = vld [vmem:[%s1 + $0x50] sm:$0xff]
  %v38 = vld [vmem:[%s1 + $0x58] sm:$0xff]
  %v39 = vld [vmem:[%s1 + $0x60] sm:$0xff]
  %v40 = vld [vmem:[%s1 + $0x68] sm:$0xff]
  %v41 = vld [vmem:[%s1 + $0x70] sm:$0xff]
  %v42 = vld [vmem:[%s1 + $0x78] sm:$0xff]
  %v43 = vld [vmem:[%s1 + $0x80] sm:$0xff]
  %v44 = vld [vmem:[%s1 + $0x88] sm:$0xff]
  %v45 = vld [vmem:[%s1 + $0x90] sm:$0xff]
  %v46 = vld [vmem:[%s1 + $0x98] sm:$0xff]
  %v47 = vld [vmem:[%s1 + $0xa0] sm:$0xff]
  %v48 = vld [vmem:[%s1 + $0xa8] sm:$0xff]
  %v49 = vld [vmem:[%s1 + $0xb0] sm:$0xff]
  %v50 = vld [vmem:[%s1 + $0xb8] sm:$0xff]
  %v51 = vld [vmem:[%s1 + $0xc0] sm:$0xff]
  %v52 = vld [vmem:[%s1 + $0xc8] sm:$0xff]
  %v53 = vld [vmem:[%s1 + $0xd0] sm:$0xff]
  %v54 = vld [vmem:[%s1 + $0xd8] sm:$0xff]
  %v55 = vld [vmem:[%s1 + $0xe0] sm:$0xff]
  %v56 = vld [vmem:[%s1 + $0xe8] sm:$0xff]
  %v57 = vld [vmem:[%s1 + $0xf0] sm:$0xff]
  %v58 = vld [vmem:[%s1 + $0xf8] sm:$0xff]
  %59 = vmatprep.subr.mxu0 0.0
  %60 = vmatpush1.msra.mxu0 %v27
  %61 = vmatprep.subr.mxu0 0.0
  %62 = vmatpush1.msra.mxu0 %v28
  %63 = vmatprep.subr.mxu0 0.0
  %64 = vmatpush1.msra.mxu0 %v29
  %65 = vmatprep.subr.mxu0 0.0
  %66 = vmatpush1.msra.mxu0 %v30
  %67 = vmatprep.subr.mxu0 0.0
  %68 = vmatpush1.msra.mxu0 %v31
  %69 = vmatprep.subr.mxu0 0.0
  %70 = vmatpush1.msra.mxu0 %v32
  %71 = vmatprep.subr.mxu0 0.0
  %72 = vmatpush1.msra.mxu0 %v33
  %73 = vmatprep.subr.mxu0 0.0
  %74 = vmatpush1.msra.mxu0 %v34
  %75 = vmatprep.subr.mxu0 0.0
  %76 = vmatpush1.msra.mxu0 %v35
  %77 = vmatprep.subr.mxu0 0.0
  %78 = vmatpush1.msra.mxu0 %v36
  %79 = vmatprep.subr.mxu0 0.0
  %80 = vmatpush1.msra.mxu0 %v37
  %81 = vmatprep.subr.mxu0 0.0
  %82 = vmatpush1.msra.mxu0 %v38
  %83 = vmatprep.subr.mxu0 0.0
  %84 = vmatpush1.msra.mxu0 %v39
  %85 = vmatprep.subr.mxu0 0.0
  %86 = vmatpush1.msra.mxu0 %v40
  %87 = vmatprep.subr.mxu0 0.0
  %88 = vmatpush1.msra.mxu0 %v41
  %89 = vmatprep.subr.mxu0 0.0
  %90 = vmatpush1.msra.mxu0 %v42
  %91 = vmatprep.subr.mxu0 0.0
  %92 = vmatpush1.msra.mxu0 %v43
  %93 = vmatprep.subr.mxu0 0.0
  %94 = vmatpush1.msra.mxu0 %v44
  %95 = vmatprep.subr.mxu0 0.0
  %96 = vmatpush1.msra.mxu0 %v45
  %97 = vmatprep.subr.mxu0 0.0
  %98 = vmatpush1.msra.mxu0 %v46
  %99 = vmatprep.subr.mxu0 0.0
  %100 = vmatpush1.msra.mxu0 %v47
  %101 = vmatprep.subr.mxu0 0.0
  %102 = vmatpush1.msra.mxu0 %v48
  %103 = vmatprep.subr.mxu0 0.0
  %104 = vmatpush1.msra.mxu0 %v49
  %105 = vmatprep.subr.mxu0 0.0
  %106 = vmatpush1.msra.mxu0 %v50
  %107 = vmatprep.subr.mxu0 0.0
  %108 = vmatpush1.msra.mxu0 %v51
  %109 = vmatprep.subr.mxu0 0.0
  %110 = vmatpush1.msra.mxu0 %v52
  %111 = vmatprep.subr.mxu0 0.0
  %112 = vmatpush1.msra.mxu0 %v53
  %113 = vmatprep.subr.mxu0 0.0
  %114 = vmatpush1.msra.mxu0 %v54
  %115 = vmatprep.subr.mxu0 0.0
  %116 = vmatpush1.msra.mxu0 %v55
  %117 = vmatprep.subr.mxu0 0.0
  %118 = vmatpush1.msra.mxu0 %v56
  %119 = vmatprep.subr.mxu0 0.0
  %120 = vmatpush1.msra.mxu0 %v57
  %121 = vmatprep.subr.mxu0 0.0
  %122 = vmatpush1.msra.mxu0 %v58
  %123 = vmatprep.mubr.f32.mxu0 %v12
  %124 = vmatmul.mubr.f32.gmra.mrb[0].mxu0 %v11
  %v125 = vpop.f32.mrb[0].mxu0
  %v126 = vadd.f32 0.0, %v125
  %v127 = vpop.f32.mrb[0].mxu0
  %128 = vmatprep.mubr.f32.mxu0 %v14
  %129 = vmatmul.mubr.f32.gmra.mrb[0].mxu0 %v13
  %v130 = vpop.f32.mrb[0].mxu0
  %v131 = vadd.f32 0.0, %v130
  %v132 = vpop.f32.mrb[0].mxu0
  %133 = vmatprep.mubr.f32.mxu0 %v16
  %134 = vmatmul.mubr.f32.gmra.mrb[0].mxu0 %v15
  %v135 = vpop.f32.mrb[0].mxu0
  %v136 = vadd.f32 0.0, %v135
  %v137 = vpop.f32.mrb[0].mxu0
  %138 = vmatprep.mubr.f32.mxu0 %v18
  %139 = vmatmul.mubr.f32.gmra.mrb[0].mxu0 %v17
  %v140 = vpop.f32.mrb[0].mxu0
  %v141 = vadd.f32 0.0, %v140
  %v142 = vpop.f32.mrb[0].mxu0
  %143 = vmatprep.mubr.f32.mxu0 %v20
  %144 = vmatmul.mubr.f32.gmra.mrb[0].mxu0 %v19
  %v145 = vpop.f32.mrb[0].mxu0
  %v146 = vadd.f32 0.0, %v145
  %v147 = vpop.f32.mrb[0].mxu0
  %148 = vmatprep.mubr.f32.mxu0 %v22
  %149 = vmatmul.mubr.f32.gmra.mrb[0].mxu0 %v21
  %v150 = vpop.f32.mrb[0].mxu0
  %v151 = vadd.f32 0.0, %v150
  %v152 = vpop.f32.mrb[0].mxu0
  %153 = vmatprep.mubr.f32.mxu0 %v24
  %154 = vmatmul.mubr.f32.gmra.mrb[0].mxu0 %v23
  %v155 = vpop.f32.mrb[0].mxu0
  %v156 = vadd.f32 0.0, %v155
  %v157 = vpop.f32.mrb[0].mxu0
  %158 = vmatprep.mubr.f32.mxu0 %v26
  %159 = vmatmul.mubr.f32.gmra.mrb[0].mxu0 %v25
  %v160 = vpop.f32.mrb[0].mxu0
  %v161 = vadd.f32 0.0, %v160
  %v162 = vpop.f32.mrb[0].mxu0
  %163 = vdwg.mxu0
  %164 = vst [vmem:[%s2] sm:$0xff] %v126
  %165 = vst [vmem:[%s2 + $0x8] sm:$0xff] %v131
  %166 = vst [vmem:[%s2 + $0x10] sm:$0xff] %v136
  %167 = vst [vmem:[%s2 + $0x18] sm:$0xff] %v141
  %168 = vst [vmem:[%s2 + $0x20] sm:$0xff] %v146
  %169 = vst [vmem:[%s2 + $0x28] sm:$0xff] %v151
  %170 = vst [vmem:[%s2 + $0x30] sm:$0xff] %v156
  %171 = vst [vmem:[%s2 + $0x38] sm:$0xff] %v161
  // Predicated region
  $region10: #{_bicubic_resample.1} parent=0 // pred_check
    _
  $region11: #{_bicubic_resample.1} parent=0 // pred_check_branch
    %173 = sbr.rel (0) target = $region13
  $region12: #{_bicubic_resample.1} parent=0 // pred_region
    _
  $region13: #{_bicubic_resample.1} parent=0 // pred_fallthru
    _
  // Predicated region
  $region14: #{_bicubic_resample.1} parent=0 // pred_check
    _
  $region15: #{_bicubic_resample.1} parent=0 // pred_check_branch
    %175 = sbr.rel (0) target = $region17
  $region16: #{_bicubic_resample.1} parent=0 // pred_region
    _
  $region17: #{_bicubic_resample.1} parent=0 // pred_fallthru
    _

</llo_original>
